<compile_context>
chip_gen: v7x
topology: tpu7x:2x2x1
jax: 0.10.0
libtpu: 0.0.40
codegen_flags: <defaults>
</compile_context>

<pallas_src>
import functools

import jax
import jax.numpy as jnp
from jax.experimental import pallas as pl
from jax.experimental.pallas import tpu as pltpu


def feature_mixing_kernel(x_ref, scale_ref, shift_ref,
                          w1_ref, b1_ref, w2_ref, b2_ref, o_ref, *, block_b):
    # x_ref / o_ref block: (block_b, N, tT)   -- PyTorch layout, T on lanes
    scale = scale_ref[...]            # (N, 1)     f32
    shift = shift_ref[...]            # (N, 1)     f32
    w1 = w1_ref[...]                  # (d_ff, N)  compute dtype (bf16 or f32)
    w2 = w2_ref[...]                  # (N, d_ff)  compute dtype
    b1 = b1_ref[...]                  # (d_ff, 1)  f32
    b2 = b2_ref[...]                  # (N, 1)     f32

    # Small, fully-unrolled loop over packed batch elements (block_b is tiny).
    for i in range(block_b):
        x = x_ref[i]                                      # (N, tT) f32
        # eval-mode BatchNorm2d folded into per-feature scale/shift (f32)
        x_proj = x * scale + shift                        # (N, tT) f32
        # fc1 + ReLU: contract over N, weights on the left -> (d_ff, tT)
        h = jnp.dot(w1, x_proj.astype(w1.dtype),
                    preferred_element_type=jnp.float32) + b1
        h = jnp.maximum(h, 0.0)
        # dropout is identity at inference time
        # fc2: (N, d_ff) @ (d_ff, tT) -> (N, tT)
        y = jnp.dot(w2, h.astype(w2.dtype),
                    preferred_element_type=jnp.float32) + b2
        # residual with the normalized input, still in [N, T] layout (no permutes)
        o_ref[i] = (x_proj + y).astype(o_ref.dtype)


def feature_mixing(x, gamma, beta, running_mean, running_var,
                   w1, b1, w2, b2, eps=1e-5,
                   compute_dtype=jnp.bfloat16, block_t=None, block_b=None):
    """x: [B, N, T] float32; torch-style params:
       w1: (d_ff, N), b1: (d_ff,), w2: (N, d_ff), b2: (N,). Returns [B, N, T]."""
    B, N, T = x.shape
    d_ff = w1.shape[0]

    # Fold eval-mode BatchNorm2d(N) into per-channel scale/shift (f32).
    scale = (gamma / jnp.sqrt(running_var + eps)).astype(jnp.float32)      # (N,)
    shift = (beta - running_mean * scale).astype(jnp.float32)              # (N,)

    # ---- tiling choices ------------------------------------------------------
    # T tile: must be a multiple of 128 (lane axis) or the full extent.
    if block_t is None:
        block_t = T
        for cand in (512, 384, 256, 128):
            if T % cand == 0:
                block_t = cand
                break
    assert T % block_t == 0, "block_t must divide T"
    n_t = T // block_t

    # Pack batch elements per grid step to amortize per-step overhead, but keep
    # at least 2 grid steps (megacore on v7x) and a modest per-step footprint.
    if block_b is None:
        block_b = 1
        x_tile_bytes = N * block_t * x.dtype.itemsize
        while (B % (block_b * 2) == 0
               and block_b < 8
               and block_b * 2 * x_tile_bytes <= (2 << 20)
               and (B // (block_b * 2)) * n_t >= 2):
            block_b *= 2
    assert B % block_b == 0, "block_b must divide B"
    n_b = B // block_b

    kernel = functools.partial(feature_mixing_kernel, block_b=block_b)

    out = pl.pallas_call(
        kernel,
        out_shape=jax.ShapeDtypeStruct((B, N, T), x.dtype),
        grid_spec=pltpu.PrefetchScalarGridSpec(
            num_scalar_prefetch=0,
            grid=(n_b, n_t),
            in_specs=[
                pl.BlockSpec((block_b, N, block_t), lambda b, t: (b, 0, t)),  # x
                pl.BlockSpec((N, 1), lambda b, t: (0, 0)),                    # BN scale
                pl.BlockSpec((N, 1), lambda b, t: (0, 0)),                    # BN shift
                pl.BlockSpec((d_ff, N), lambda b, t: (0, 0)),                 # W1
                pl.BlockSpec((d_ff, 1), lambda b, t: (0, 0)),                 # b1
                pl.BlockSpec((N, d_ff), lambda b, t: (0, 0)),                 # W2
                pl.BlockSpec((N, 1), lambda b, t: (0, 0)),                    # b2
            ],
            out_specs=pl.BlockSpec((block_b, N, block_t), lambda b, t: (b, 0, t)),
        ),
        compiler_params=pltpu.CompilerParams(
            dimension_semantics=("parallel", "parallel"),
            vmem_limit_bytes=48 * 1024 * 1024,   # safe on v5e/v6e/v7x (64 MiB phys)
        ),
    )(x.astype(jnp.float32),
      scale.reshape(N, 1), shift.reshape(N, 1),
      w1.astype(compute_dtype), b1.reshape(d_ff, 1).astype(jnp.float32),
      w2.astype(compute_dtype), b2.reshape(N, 1).astype(jnp.float32))

    return out                                             # (B, N, T)


def feature_mixing_reference(x, gamma, beta, running_mean, running_var,
                             w1, b1, w2, b2, eps=1e-5):
    """Pure-JAX reference mirroring the PyTorch forward (eval mode)."""
    xn = ((x - running_mean[None, :, None])
          / jnp.sqrt(running_var + eps)[None, :, None]
          * gamma[None, :, None] + beta[None, :, None])
    xp = jnp.transpose(xn, (0, 2, 1))                      # (B, T, N)
    h = jnp.maximum(xp @ w1.T + b1, 0.0)
    y = h @ w2.T + b2
    out = xp + y
    return jnp.transpose(out, (0, 2, 1))                   # (B, N, T)


if __name__ == "__main__":
    B, N, T, d_ff = 2, 16, 8, 32

    key = jax.random.PRNGKey(0)
    ks = jax.random.split(key, 9)
    x = jax.random.normal(ks[0], (B, N, T), jnp.float32)

    # Deterministic synthetic parameters (torch-style shapes).
    w1 = 0.1 * jax.random.normal(ks[1], (d_ff, N), jnp.float32)   # fc1.weight
    b1 = 0.1 * jax.random.normal(ks[2], (d_ff,), jnp.float32)     # fc1.bias
    w2 = 0.1 * jax.random.normal(ks[3], (N, d_ff), jnp.float32)   # fc2.weight
    b2 = 0.1 * jax.random.normal(ks[4], (N,), jnp.float32)        # fc2.bias
    gamma = 1.0 + 0.1 * jax.random.normal(ks[5], (N,), jnp.float32)
    beta = 0.1 * jax.random.normal(ks[6], (N,), jnp.float32)
    running_mean = 0.1 * jax.random.normal(ks[7], (N,), jnp.float32)
    running_var = 1.0 + 0.1 * jnp.abs(jax.random.normal(ks[8], (N,), jnp.float32))

    ref = feature_mixing_reference(x, gamma, beta, running_mean, running_var,
                                   w1, b1, w2, b2)

    # Strict check with f32 matmuls (exact semantics).
    out_f32 = feature_mixing(x, gamma, beta, running_mean, running_var,
                             w1, b1, w2, b2, compute_dtype=jnp.float32)
    out_f32 = jax.block_until_ready(out_f32)
    assert out_f32.shape == (B, N, T)
    assert jnp.allclose(out_f32, ref, atol=1e-4, rtol=1e-4), "f32 mismatch vs reference"

    # Default fast path: bf16 MXU operands, f32 accumulate / BN / residual.
    out_bf16 = feature_mixing(x, gamma, beta, running_mean, running_var,
                              w1, b1, w2, b2)
    out_bf16 = jax.block_until_ready(out_bf16)
    assert out_bf16.shape == (B, N, T)
    assert jnp.allclose(out_bf16, ref, atol=2e-2, rtol=2e-2), "bf16 mismatch vs reference"

    print("KERNEL_OK")
</pallas_src>

<mosaic_0001>
module attributes {stable_mosaic.version = 11 : i64} {
  func.func @feature_mixing_kernel(%arg0: i32, %arg1: i32, %arg2: memref<1x16x8xf32, #tpu.memory_space<vmem>>, %arg3: memref<16x1xf32, #tpu.memory_space<vmem>>, %arg4: memref<16x1xf32, #tpu.memory_space<vmem>>, %arg5: memref<32x16xf32, #tpu.memory_space<vmem>>, %arg6: memref<32x1xf32, #tpu.memory_space<vmem>>, %arg7: memref<16x32xf32, #tpu.memory_space<vmem>>, %arg8: memref<16x1xf32, #tpu.memory_space<vmem>>, %arg9: memref<1x16x8xf32, #tpu.memory_space<vmem>>) attributes {dimension_semantics = [#tpu.dimension_semantics<parallel>, #tpu.dimension_semantics<parallel>], iteration_bounds = array<i64: 2, 1>, scalar_prefetch = 0 : i64, scratch_operands = 0 : i64, tpu.core_type = #tpu.core_type<tc>, window_params = [{transform_indices = @transform_0, window_bounds = array<i64: 1, 16, 8>}, {pipeline_mode = #tpu.pipeline_mode<synchronous>, transform_indices = @transform_1, window_bounds = array<i64: 16, 1>}, {pipeline_mode = #tpu.pipeline_mode<synchronous>, transform_indices = @transform_2, window_bounds = array<i64: 16, 1>}, {pipeline_mode = #tpu.pipeline_mode<synchronous>, transform_indices = @transform_3, window_bounds = array<i64: 32, 16>}, {pipeline_mode = #tpu.pipeline_mode<synchronous>, transform_indices = @transform_4, window_bounds = array<i64: 32, 1>}, {pipeline_mode = #tpu.pipeline_mode<synchronous>, transform_indices = @transform_5, window_bounds = array<i64: 16, 32>}, {pipeline_mode = #tpu.pipeline_mode<synchronous>, transform_indices = @transform_6, window_bounds = array<i64: 16, 1>}, {transform_indices = @transform_7, window_bounds = array<i64: 1, 16, 8>}]} {
    %c0 = arith.constant 0 : index
    %c0_0 = arith.constant 0 : index
    %0 = vector.load %arg3[%c0, %c0_0] : memref<16x1xf32, #tpu.memory_space<vmem>>, vector<16x1xf32>
    %c0_1 = arith.constant 0 : index
    %c0_2 = arith.constant 0 : index
    %1 = vector.load %arg4[%c0_1, %c0_2] : memref<16x1xf32, #tpu.memory_space<vmem>>, vector<16x1xf32>
    %c0_3 = arith.constant 0 : index
    %c0_4 = arith.constant 0 : index
    %2 = vector.load %arg5[%c0_3, %c0_4] : memref<32x16xf32, #tpu.memory_space<vmem>>, vector<32x16xf32>
    %c0_5 = arith.constant 0 : index
    %c0_6 = arith.constant 0 : index
    %3 = vector.load %arg7[%c0_5, %c0_6] : memref<16x32xf32, #tpu.memory_space<vmem>>, vector<16x32xf32>
    %c0_7 = arith.constant 0 : index
    %c0_8 = arith.constant 0 : index
    %4 = vector.load %arg6[%c0_7, %c0_8] : memref<32x1xf32, #tpu.memory_space<vmem>>, vector<32x1xf32>
    %c0_9 = arith.constant 0 : index
    %c0_10 = arith.constant 0 : index
    %5 = vector.load %arg8[%c0_9, %c0_10] : memref<16x1xf32, #tpu.memory_space<vmem>>, vector<16x1xf32>
    %c0_11 = arith.constant 0 : index
    %c0_12 = arith.constant 0 : index
    %c0_13 = arith.constant 0 : index
    %6 = vector.load %arg2[%c0_11, %c0_12, %c0_13] : memref<1x16x8xf32, #tpu.memory_space<vmem>>, vector<1x16x8xf32>
    %7 = vector.shape_cast %6 : vector<1x16x8xf32> to vector<16x8xf32>
    %8 = vector.broadcast %0 : vector<16x1xf32> to vector<16x8xf32>
    %9 = arith.mulf %7, %8 : vector<16x8xf32>
    %10 = vector.broadcast %1 : vector<16x1xf32> to vector<16x8xf32>
    %11 = arith.addf %9, %10 : vector<16x8xf32>
    %cst = arith.constant dense<0.000000e+00> : vector<32x8xf32>
    %12 = tpu.matmul %2, %11, %cst {dimension_numbers = #tpu.dot_dimension_numbers<[1], [0], [0], [1], [0, 0, 1, 1], [], []>} : vector<32x16xf32>, vector<16x8xf32>, vector<32x8xf32> -> vector<32x8xf32>
    %13 = vector.broadcast %4 : vector<32x1xf32> to vector<32x8xf32>
    %14 = arith.addf %12, %13 : vector<32x8xf32>
    %cst_14 = arith.constant 0.000000e+00 : f32
    %15 = vector.broadcast %cst_14 : f32 to vector<32x8xf32>
    %16 = arith.maximumf %14, %15 : vector<32x8xf32>
    %cst_15 = arith.constant dense<0.000000e+00> : vector<16x8xf32>
    %17 = tpu.matmul %3, %16, %cst_15 {dimension_numbers = #tpu.dot_dimension_numbers<[1], [0], [0], [1], [0, 0, 1, 1], [], []>} : vector<16x32xf32>, vector<32x8xf32>, vector<16x8xf32> -> vector<16x8xf32>
    %18 = vector.broadcast %5 : vector<16x1xf32> to vector<16x8xf32>
    %19 = arith.addf %17, %18 : vector<16x8xf32>
    %20 = arith.addf %11, %19 : vector<16x8xf32>
    %c0_16 = arith.constant 0 : index
    %c0_17 = arith.constant 0 : index
    %c0_18 = arith.constant 0 : index
    %21 = vector.load %arg9[%c0_16, %c0_17, %c0_18] : memref<1x16x8xf32, #tpu.memory_space<vmem>>, vector<1x16x8xf32>
    %22 = vector.shape_cast %21 : vector<1x16x8xf32> to vector<16x8xf32>
    %23 = vector.shape_cast %20 : vector<16x8xf32> to vector<1x16x8xf32>
    tpu.vector_store %arg9[%c0_16, %c0_17, %c0_18], %23 {strides = array<i32>} : memref<1x16x8xf32, #tpu.memory_space<vmem>>, vector<1x16x8xf32>,
    return
  }
  func.func @transform_0(%arg0: i32, %arg1: i32) -> (i32, i32, i32) {
    %c0_i32 = arith.constant 0 : i32
    %c0_i32_0 = arith.constant 0 : i32
    return %arg0, %c0_i32, %arg1 : i32, i32, i32
  }
  func.func @transform_1(%arg0: i32, %arg1: i32) -> (i32, i32) {
    %c0_i32 = arith.constant 0 : i32
    %c0_i32_0 = arith.constant 0 : i32
    %c0_i32_1 = arith.constant 0 : i32
    return %c0_i32, %c0_i32_0 : i32, i32
  }
  func.func @transform_2(%arg0: i32, %arg1: i32) -> (i32, i32) {
    %c0_i32 = arith.constant 0 : i32
    %c0_i32_0 = arith.constant 0 : i32
    %c0_i32_1 = arith.constant 0 : i32
    return %c0_i32, %c0_i32_0 : i32, i32
  }
  func.func @transform_3(%arg0: i32, %arg1: i32) -> (i32, i32) {
    %c0_i32 = arith.constant 0 : i32
    %c0_i32_0 = arith.constant 0 : i32
    %c0_i32_1 = arith.constant 0 : i32
    return %c0_i32, %c0_i32_0 : i32, i32
  }
  func.func @transform_4(%arg0: i32, %arg1: i32) -> (i32, i32) {
    %c0_i32 = arith.constant 0 : i32
    %c0_i32_0 = arith.constant 0 : i32
    %c0_i32_1 = arith.constant 0 : i32
    return %c0_i32, %c0_i32_0 : i32, i32
  }
  func.func @transform_5(%arg0: i32, %arg1: i32) -> (i32, i32) {
    %c0_i32 = arith.constant 0 : i32
    %c0_i32_0 = arith.constant 0 : i32
    %c0_i32_1 = arith.constant 0 : i32
    return %c0_i32, %c0_i32_0 : i32, i32
  }
  func.func @transform_6(%arg0: i32, %arg1: i32) -> (i32, i32) {
    %c0_i32 = arith.constant 0 : i32
    %c0_i32_0 = arith.constant 0 : i32
    %c0_i32_1 = arith.constant 0 : i32
    return %c0_i32, %c0_i32_0 : i32, i32
  }
  func.func @transform_7(%arg0: i32, %arg1: i32) -> (i32, i32, i32) {
    %c0_i32 = arith.constant 0 : i32
    %c0_i32_0 = arith.constant 0 : i32
    return %arg0, %c0_i32, %arg1 : i32, i32, i32
  }
}

</mosaic_0001>

<llo_original>
// kernel: tpu_custom_call.1
$region0: #{tpu_custom_call.1}
  #allocation0 [shape = 'u32[]', space=smem, size = 0x4, offset = 0x4, fixed_abs, tag = 'smem constant byte address 0x4 - core index']
  #allocation1 [shape = 'u32[144,128]{1,0:T(1,128)}', space=vmem, size = 0x12000, scoped, tag = 'internal scratch']
  %s0 = inlined_call_operand.vmem [shape: f32[2,16,8], index: 0, kind: input, shape index: {}]
  %s1 = inlined_call_operand.vmem [shape: f32[16,1], index: 1, kind: input, shape index: {}]
  %s2 = inlined_call_operand.vmem [shape: f32[16,1], index: 2, kind: input, shape index: {}]
  %s3 = inlined_call_operand.vmem [shape: f32[32,16], index: 3, kind: input, shape index: {}]
  %s4 = inlined_call_operand.vmem [shape: f32[32,1], index: 4, kind: input, shape index: {}]
  %s5 = inlined_call_operand.vmem [shape: f32[16,32], index: 5, kind: input, shape index: {}]
  %s6 = inlined_call_operand.vmem [shape: f32[16,1], index: 6, kind: input, shape index: {}]
  %s7 = inlined_call_operand.vmem [shape: f32[2,16,8], index: 7, kind: output, shape index: {}]
  %s8 = sld [smem:[#allocation0]]
  $region61: #{tpu_custom_call.1} parent=0
    _
  %s10 = ssub.s32 1, %s8
  %s11 = scalar_select 0, %s10, %s8
  loop: start=0, step=1, limit=4
  $region2: #{tpu_custom_call.1} parent=0 // loop_pre_header
    _
  $region3: #{tpu_custom_call.1} parent=0 // loop_header
    %s13 = sphi 0, %s17
    %p14 = scmp.ge.s32.totalorder %s13, 4
    %s20 = sphi 0, %s32
    %s21 = sphi 0, %s28
    %s22 = sphi 0, %s20
    %s23 = sphi 0, %s21
    %s24 = sphi 0, %s22
    %s25 = sphi 0, %s23
    %s37 = sphi 0, %s39
    %s40 = sphi 0, %s37
    %s41 = sphi 0, %s40
    %s57 = sphi 0, %s41
    %s61 = sphi 0, %s61
    %s63 = sphi 0, %s61
    %s64 = sphi 0, %s63
    %s78 = sphi 0, %s64
    %s82 = sphi 0, %s82
    %s84 = sphi 0, %s82
    %s85 = sphi 0, %s84
    %s99 = sphi 0, %s85
    %s103 = sphi 0, %s103
    %s105 = sphi 0, %s103
    %s106 = sphi 0, %s105
    %s120 = sphi 0, %s106
    %s124 = sphi 0, %s124
    %s126 = sphi 0, %s124
    %s127 = sphi 0, %s126
    %s141 = sphi 0, %s127
    %s145 = sphi 0, %s145
    %s147 = sphi 0, %s145
    %s148 = sphi 0, %s147
    %s162 = sphi 0, %s148
    %s166 = sphi 0, %s166
    %s168 = sphi 0, %s166
    %s169 = sphi 0, %s168
    %s183 = sphi 0, %s169
    %s191 = sphi 0, %s193
    %s194 = sphi 0, %s191
    %s195 = sphi 0, %s194
    %s211 = sphi 0, %s195
  $region4: #{tpu_custom_call.1} parent=0 // loop_header_branch
    %16 = sbr.rel (%p14) target = $region8
  $region5: #{tpu_custom_call.1} parent=0 // loop_body
    %s18 = ssub.s32 %s13, 1
    %s19 = ssub.s32 %s13, 2
    %s26 = sadd.s32 1, %s21
    %p27 = scmp.ge.s32.totalorder %s26, 1
    %s28 = scalar_select %p27, 0, %s26
    %s29 = sadd.s32 1, %s20
    %s30 = scalar_select %p27, %s29, %s20
    %p31 = scmp.ge.s32.totalorder %s30, 2
    %s32 = scalar_select %p31, 0, %s30
    %s33 = ssub.s32 %s20, %s32
    %s34 = ssub.s32 %s21, %s28
    %s35 = sor.u32 %s33, %s34
    %p36 = scmp.eq.s32.totalorder %s35, 0
    %s38 = sadd.s32 %s37, 1
    %s39 = scalar_select %p36, %s37, %s38
    %p42 = pneg %p36
    %p43 = scmp.eq.s32.totalorder %s13, 1
    %p44 = por %p42, %p43
    %p45 = scmp.ne.s32.totalorder %s37, %s40
    %p46 = scmp.eq.s32.totalorder %s13, 0
    %p47 = por %p45, %p46
    %p48 = scmp.ne.s32.totalorder %s37, %s40
    %p49 = scmp.eq.s32.totalorder %s18, 1
    %p50 = por %p48, %p49
    %p51 = scmp.ne.s32.totalorder %s40, %s41
    %p52 = scmp.eq.s32.totalorder %s18, 0
    %p53 = por %p51, %p52
    %p54 = scmp.ne.s32.totalorder %s40, %s41
    %p55 = scmp.eq.s32.totalorder %s19, 1
    %p56 = por %p54, %p55
    %p58 = scmp.ne.s32.totalorder %s41, %s57
    %p59 = scmp.eq.s32.totalorder %s19, 0
    %p60 = por %p58, %p59
    %s62 = sadd.s32 %s61, 1
    %p65 = scmp.eq.s32.totalorder %s13, 1
    %p66 = scmp.ne.s32.totalorder %s61, %s63
    %p67 = scmp.eq.s32.totalorder %s13, 0
    %p68 = por %p66, %p67
    %p69 = scmp.ne.s32.totalorder %s61, %s63
    %p70 = scmp.eq.s32.totalorder %s18, 1
    %p71 = por %p69, %p70
    %p72 = scmp.ne.s32.totalorder %s63, %s64
    %p73 = scmp.eq.s32.totalorder %s18, 0
    %p74 = por %p72, %p73
    %p75 = scmp.ne.s32.totalorder %s63, %s64
    %p76 = scmp.eq.s32.totalorder %s19, 1
    %p77 = por %p75, %p76
    %p79 = scmp.ne.s32.totalorder %s64, %s78
    %p80 = scmp.eq.s32.totalorder %s19, 0
    %p81 = por %p79, %p80
    %s83 = sadd.s32 %s82, 1
    %p86 = scmp.eq.s32.totalorder %s13, 1
    %p87 = scmp.ne.s32.totalorder %s82, %s84
    %p88 = scmp.eq.s32.totalorder %s13, 0
    %p89 = por %p87, %p88
    %p90 = scmp.ne.s32.totalorder %s82, %s84
    %p91 = scmp.eq.s32.totalorder %s18, 1
    %p92 = por %p90, %p91
    %p93 = scmp.ne.s32.totalorder %s84, %s85
    %p94 = scmp.eq.s32.totalorder %s18, 0
    %p95 = por %p93, %p94
    %p96 = scmp.ne.s32.totalorder %s84, %s85
    %p97 = scmp.eq.s32.totalorder %s19, 1
    %p98 = por %p96, %p97
    %p100 = scmp.ne.s32.totalorder %s85, %s99
    %p101 = scmp.eq.s32.totalorder %s19, 0
    %p102 = por %p100, %p101
    %s104 = sadd.s32 %s103, 1
    %p107 = scmp.eq.s32.totalorder %s13, 1
    %p108 = scmp.ne.s32.totalorder %s103, %s105
    %p109 = scmp.eq.s32.totalorder %s13, 0
    %p110 = por %p108, %p109
    %p111 = scmp.ne.s32.totalorder %s103, %s105
    %p112 = scmp.eq.s32.totalorder %s18, 1
    %p113 = por %p111, %p112
    %p114 = scmp.ne.s32.totalorder %s105, %s106
    %p115 = scmp.eq.s32.totalorder %s18, 0
    %p116 = por %p114, %p115
    %p117 = scmp.ne.s32.totalorder %s105, %s106
    %p118 = scmp.eq.s32.totalorder %s19, 1
    %p119 = por %p117, %p118
    %p121 = scmp.ne.s32.totalorder %s106, %s120
    %p122 = scmp.eq.s32.totalorder %s19, 0
    %p123 = por %p121, %p122
    %s125 = sadd.s32 %s124, 1
    %p128 = scmp.eq.s32.totalorder %s13, 1
    %p129 = scmp.ne.s32.totalorder %s124, %s126
    %p130 = scmp.eq.s32.totalorder %s13, 0
    %p131 = por %p129, %p130
    %p132 = scmp.ne.s32.totalorder %s124, %s126
    %p133 = scmp.eq.s32.totalorder %s18, 1
    %p134 = por %p132, %p133
    %p135 = scmp.ne.s32.totalorder %s126, %s127
    %p136 = scmp.eq.s32.totalorder %s18, 0
    %p137 = por %p135, %p136
    %p138 = scmp.ne.s32.totalorder %s126, %s127
    %p139 = scmp.eq.s32.totalorder %s19, 1
    %p140 = por %p138, %p139
    %p142 = scmp.ne.s32.totalorder %s127, %s141
    %p143 = scmp.eq.s32.totalorder %s19, 0
    %p144 = por %p142, %p143
    %s146 = sadd.s32 %s145, 1
    %p149 = scmp.eq.s32.totalorder %s13, 1
    %p150 = scmp.ne.s32.totalorder %s145, %s147
    %p151 = scmp.eq.s32.totalorder %s13, 0
    %p152 = por %p150, %p151
    %p153 = scmp.ne.s32.totalorder %s145, %s147
    %p154 = scmp.eq.s32.totalorder %s18, 1
    %p155 = por %p153, %p154
    %p156 = scmp.ne.s32.totalorder %s147, %s148
    %p157 = scmp.eq.s32.totalorder %s18, 0
    %p158 = por %p156, %p157
    %p159 = scmp.ne.s32.totalorder %s147, %s148
    %p160 = scmp.eq.s32.totalorder %s19, 1
    %p161 = por %p159, %p160
    %p163 = scmp.ne.s32.totalorder %s148, %s162
    %p164 = scmp.eq.s32.totalorder %s19, 0
    %p165 = por %p163, %p164
    %s167 = sadd.s32 %s166, 1
    %p170 = scmp.eq.s32.totalorder %s13, 1
    %p171 = scmp.ne.s32.totalorder %s166, %s168
    %p172 = scmp.eq.s32.totalorder %s13, 0
    %p173 = por %p171, %p172
    %p174 = scmp.ne.s32.totalorder %s166, %s168
    %p175 = scmp.eq.s32.totalorder %s18, 1
    %p176 = por %p174, %p175
    %p177 = scmp.ne.s32.totalorder %s168, %s169
    %p178 = scmp.eq.s32.totalorder %s18, 0
    %p179 = por %p177, %p178
    %p180 = scmp.ne.s32.totalorder %s168, %s169
    %p181 = scmp.eq.s32.totalorder %s19, 1
    %p182 = por %p180, %p181
    %p184 = scmp.ne.s32.totalorder %s169, %s183
    %p185 = scmp.eq.s32.totalorder %s19, 0
    %p186 = por %p184, %p185
    %s187 = ssub.s32 %s20, %s32
    %s188 = ssub.s32 %s21, %s28
    %s189 = sor.u32 %s187, %s188
    %p190 = scmp.eq.s32.totalorder %s189, 0
    %s192 = sadd.s32 %s191, 1
    %s193 = scalar_select %p190, %s191, %s192
    %p196 = pneg %p190
    %p197 = scmp.eq.s32.totalorder %s13, 1
    %p198 = por %p196, %p197
    %p199 = scmp.ne.s32.totalorder %s191, %s194
    %p200 = scmp.eq.s32.totalorder %s13, 0
    %p201 = por %p199, %p200
    %p202 = scmp.ne.s32.totalorder %s191, %s194
    %p203 = scmp.eq.s32.totalorder %s18, 1
    %p204 = por %p202, %p203
    %p205 = scmp.ne.s32.totalorder %s194, %s195
    %p206 = scmp.eq.s32.totalorder %s18, 0
    %p207 = por %p205, %p206
    %p208 = scmp.ne.s32.totalorder %s194, %s195
    %p209 = scmp.eq.s32.totalorder %s19, 1
    %p210 = por %p208, %p209
    %p212 = scmp.ne.s32.totalorder %s195, %s211
    %p213 = scmp.eq.s32.totalorder %s19, 0
    %p214 = por %p212, %p213
    %p215 = scmp.le.s32.totalorder 1, %s13
    %p216 = scmp.lt.s32.totalorder %s13, 3
    %p217 = pnand %p215, %p216
    %p218 = pneg %p217
    // Predicated region
    $region9: #{tpu_custom_call.1} parent=5 // pred_check
      _
    $region10: #{tpu_custom_call.1} parent=5 // pred_check_branch
      %220 = sbr.rel (%p217) target = $region12
    $region11: #{tpu_custom_call.1} parent=5 // pred_region
      %s221 = ssub.s32 %s13, 1
      // Predicated region
      $region13: #{tpu_custom_call.1} parent=11 // pred_check
        %p222 = pneg %p74
      $region14: #{tpu_custom_call.1} parent=11 // pred_check_branch
        %224 = sbr.rel (%p222) target = $region16
      $region15: #{tpu_custom_call.1} parent=11 // pred_region
        _
      $region16: #{tpu_custom_call.1} parent=11 // pred_fallthru
        _
      // Predicated region
      $region17: #{tpu_custom_call.1} parent=11 // pred_check
        %p225 = pneg %p95
      $region18: #{tpu_custom_call.1} parent=11 // pred_check_branch
        %227 = sbr.rel (%p225) target = $region20
      $region19: #{tpu_custom_call.1} parent=11 // pred_region
        _
      $region20: #{tpu_custom_call.1} parent=11 // pred_fallthru
        _
      // Predicated region
      $region21: #{tpu_custom_call.1} parent=11 // pred_check
        %p228 = pneg %p116
      $region22: #{tpu_custom_call.1} parent=11 // pred_check_branch
        %230 = sbr.rel (%p228) target = $region24
      $region23: #{tpu_custom_call.1} parent=11 // pred_region
        _
      $region24: #{tpu_custom_call.1} parent=11 // pred_fallthru
        _
      // Predicated region
      $region25: #{tpu_custom_call.1} parent=11 // pred_check
        %p231 = pneg %p137
      $region26: #{tpu_custom_call.1} parent=11 // pred_check_branch
        %233 = sbr.rel (%p231) target = $region28
      $region27: #{tpu_custom_call.1} parent=11 // pred_region
        _
      $region28: #{tpu_custom_call.1} parent=11 // pred_fallthru
        _
      // Predicated region
      $region29: #{tpu_custom_call.1} parent=11 // pred_check
        %p234 = pneg %p158
      $region30: #{tpu_custom_call.1} parent=11 // pred_check_branch
        %236 = sbr.rel (%p234) target = $region32
      $region31: #{tpu_custom_call.1} parent=11 // pred_region
        _
      $region32: #{tpu_custom_call.1} parent=11 // pred_fallthru
        _
      // Predicated region
      $region33: #{tpu_custom_call.1} parent=11 // pred_check
        %p237 = pneg %p179
      $region34: #{tpu_custom_call.1} parent=11 // pred_check_branch
        %239 = sbr.rel (%p237) target = $region36
      $region35: #{tpu_custom_call.1} parent=11 // pred_region
        _
      $region36: #{tpu_custom_call.1} parent=11 // pred_fallthru
        _
    $region12: #{tpu_custom_call.1} parent=5 // pred_fallthru
      _
    %p240 = scmp.lt.s32.totalorder %s13, 2
    // Predicated region
    $region37: #{tpu_custom_call.1} parent=5 // pred_check
      %p241 = pneg %p240
    $region38: #{tpu_custom_call.1} parent=5 // pred_check_branch
      %243 = sbr.rel (%p241) target = $region40
    $region39: #{tpu_custom_call.1} parent=5 // pred_region
      // Predicated region
      $region41: #{tpu_custom_call.1} parent=39 // pred_check
        %p244 = pneg %p47
      $region42: #{tpu_custom_call.1} parent=39 // pred_check_branch
        %246 = sbr.rel (%p244) target = $region44
      $region43: #{tpu_custom_call.1} parent=39 // pred_region
        %p247 = scmp.lt.s32.totalorder %s20, 1
        %s248 = scalar_select %p247, %s20, 1
        %p249 = scmp.lt.s32.totalorder %s21, 0
        %s250 = scalar_select %p249, %s21, 0
        %s251 = smul.addr %s248, 2
        %s252 = sadd.s32 %s250, %s251
        %s253 = smul.addr %s252, 8
        %s254 = scalar_lea.vmem %s0, %s253
      $region44: #{tpu_custom_call.1} parent=39 // pred_fallthru
        _
    $region40: #{tpu_custom_call.1} parent=5 // pred_fallthru
      _
    %p255 = scmp.le.s32.totalorder 1, %s13
    %p256 = scmp.lt.s32.totalorder %s13, 3
    %p257 = pnand %p255, %p256
    %p258 = pneg %p257
    // Predicated region
    $region45: #{tpu_custom_call.1} parent=5 // pred_check
      _
    $region46: #{tpu_custom_call.1} parent=5 // pred_check_branch
      %260 = sbr.rel (%p257) target = $region48
    $region47: #{tpu_custom_call.1} parent=5 // pred_region
      %s261 = ssub.s32 %s13, 1
      %p262 = scmp.lt.s32.totalorder %s22, 1
      %s263 = scalar_select %p262, %s22, 1
      %p264 = scmp.lt.s32.totalorder %s23, 0
      %s265 = scalar_select %p264, %s23, 0
      %s266 = smul.addr %s263, 2
      %s267 = sadd.s32 %s265, %s266
      %s268 = smul.addr %s267, 8
      %s269 = scalar_lea.vmem %s0, %s268
      %p270 = pneg %p53
      %p271 = pneg %p50
      %p272 = pneg %p74
      %p273 = pneg %p71
      %p274 = pneg %p95
      %p275 = pneg %p92
      %p276 = pneg %p116
      %p277 = pneg %p113
      %p278 = pneg %p137
      %p279 = pneg %p134
      %p280 = pneg %p158
      %p281 = pneg %p155
      %p282 = pneg %p179
      %p283 = pneg %p176
      %p284 = pneg %p207
      %p285 = pneg %p204
      %p286 = scmp.lt.s32.totalorder %s22, 1
      %s287 = scalar_select %p286, %s22, 1
      %p288 = scmp.lt.s32.totalorder %s23, 0
      %s289 = scalar_select %p288, %s23, 0
      %s290 = smul.addr %s287, 2
      %s291 = sadd.s32 %s289, %s290
      %s292 = smul.addr %s291, 8
      %s293 = scalar_lea.vmem %s7, %s292
      %p294 = scmp.lt.s32.totalorder %s22, 1
      %s295 = scalar_select %p294, %s22, 1
      %p296 = scmp.lt.s32.totalorder %s23, 0
      %s297 = scalar_select %p296, %s23, 0
      %s298 = smul.addr %s295, 2
      %s299 = sadd.s32 %s297, %s298
      %s300 = smul.addr %s299, 8
      %s301 = scalar_lea.vmem %s0, %s300
      %p302 = scmp.lt.s32.totalorder %s22, 1
      %s303 = scalar_select %p302, %s22, 1
      %p304 = scmp.lt.s32.totalorder %s23, 0
      %s305 = scalar_select %p304, %s23, 0
      %s306 = smul.addr %s303, 2
      %s307 = sadd.s32 %s305, %s306
      %s308 = smul.addr %s307, 8
      %s309 = scalar_lea.vmem %s7, %s308
      %v310 = vld [vmem:[%s1] sm:$0xff]
      %v311 = vld [vmem:[%s1 + $0x8] sm:$0xff]
      %v312 = vld [vmem:[%s2] sm:$0xff]
      %v313 = vld [vmem:[%s2 + $0x8] sm:$0xff]
      %v314 = vld [vmem:[%s3] sm:$0xff]
      %v315 = vld [vmem:[%s3 + $0x8] sm:$0xff]
      %v316 = vld [vmem:[%s3 + $0x10] sm:$0xff]
      %v317 = vld [vmem:[%s3 + $0x18] sm:$0xff]
      %v318 = vld [vmem:[%s5] sm:$0xff]
      %v319 = vld [vmem:[%s5 + $0x8] sm:$0xff]
      %v320 = vld [vmem:[%s4] sm:$0xff]
      %v321 = vld [vmem:[%s4 + $0x8] sm:$0xff]
      %v322 = vld [vmem:[%s4 + $0x10] sm:$0xff]
      %v323 = vld [vmem:[%s4 + $0x18] sm:$0xff]
      %v324 = vld [vmem:[%s6] sm:$0xff]
      %v325 = vld [vmem:[%s6 + $0x8] sm:$0xff]
      %v326 = vld [vmem:[%s301] sm:$0xff]
      %v327 = vld [vmem:[%s301 + $0x8] sm:$0xff]
      %329 = vset.pattern.permute.xlu0 0
      %330 = vperm.xlu0 %329, %v310
      %v331 = vpop.permute.xlu0 %330
      %334 = vset.pattern.permute.xlu0 0
      %335 = vperm.xlu0 %334, %v311
      %v336 = vpop.permute.xlu0 %335
      %v338 = vmul.f32 %v326, %v331
      %v339 = vmul.f32 %v327, %v336
      %341 = vset.pattern.permute.xlu0 0
      %342 = vperm.xlu0 %341, %v312
      %v343 = vpop.permute.xlu0 %342
      %346 = vset.pattern.permute.xlu0 0
      %347 = vperm.xlu0 %346, %v313
      %v348 = vpop.permute.xlu0 %347
      %v350 = vadd.f32 %v338, %v343
      %v351 = vadd.f32 %v339, %v348
      %353 = vset.pattern.permute.xlu0 0
      %354 = vperm.xlu0 %353, %v320
      %v355 = vpop.permute.xlu0 %354
      %358 = vset.pattern.permute.xlu0 0
      %359 = vperm.xlu0 %358, %v321
      %v360 = vpop.permute.xlu0 %359
      %363 = vset.pattern.permute.xlu0 0
      %364 = vperm.xlu0 %363, %v322
      %v365 = vpop.permute.xlu0 %364
      %368 = vset.pattern.permute.xlu0 0
      %369 = vperm.xlu0 %368, %v323
      %v370 = vpop.permute.xlu0 %369
      %vm372 = vcmask 130048
      %v374 = vsel %vm372, %v314, 0
      %v377 = vsel %vm372, %v315, 0
      %v380 = vsel %vm372, %v316, 0
      %v383 = vsel %vm372, %v317, 0
      %385 = vmatprep.subr.mxu0 0.0
      %386 = vmatpush1.msra.mxu0 %v350
      %387 = vmatprep.subr.mxu0 0.0
      %388 = vmatpush1.msra.mxu0 %v351
      %389 = vmatprep.subr.mxu0 0.0
      %390 = vmatpush1.msra.mxu0 0.0
      %391 = vmatprep.subr.mxu0 0.0
      %392 = vmatpush1.msra.mxu0 0.0
      %393 = vmatprep.subr.mxu0 0.0
      %394 = vmatpush1.msra.mxu0 0.0
      %395 = vmatprep.subr.mxu0 0.0
      %396 = vmatpush1.msra.mxu0 0.0
      %397 = vmatprep.subr.mxu0 0.0
      %398 = vmatpush1.msra.mxu0 0.0
      %399 = vmatprep.subr.mxu0 0.0
      %400 = vmatpush1.msra.mxu0 0.0
      %401 = vmatprep.subr.mxu0 0.0
      %402 = vmatpush1.msra.mxu0 0.0
      %403 = vmatprep.subr.mxu0 0.0
      %404 = vmatpush1.msra.mxu0 0.0
      %405 = vmatprep.subr.mxu0 0.0
      %406 = vmatpush1.msra.mxu0 0.0
      %407 = vmatprep.subr.mxu0 0.0
      %408 = vmatpush1.msra.mxu0 0.0
      %409 = vmatprep.subr.mxu0 0.0
      %410 = vmatpush1.msra.mxu0 0.0
      %411 = vmatprep.subr.mxu0 0.0
      %412 = vmatpush1.msra.mxu0 0.0
      %413 = vmatprep.subr.mxu0 0.0
      %414 = vmatpush1.msra.mxu0 0.0
      %415 = vmatprep.subr.mxu0 0.0
      %416 = vmatpush1.msra.mxu0 0.0
      %417 = vmatprep.subr.mxu0 0.0
      %418 = vmatpush1.msra.mxu0 0.0
      %419 = vmatprep.subr.mxu0 0.0
      %420 = vmatpush1.msra.mxu0 0.0
      %421 = vmatprep.subr.mxu0 0.0
      %422 = vmatpush1.msra.mxu0 0.0
      %423 = vmatprep.subr.mxu0 0.0
      %424 = vmatpush1.msra.mxu0 0.0
      %425 = vmatprep.subr.mxu0 0.0
      %426 = vmatpush1.msra.mxu0 0.0
      %427 = vmatprep.subr.mxu0 0.0
      %428 = vmatpush1.msra.mxu0 0.0
      %429 = vmatprep.subr.mxu0 0.0
      %430 = vmatpush1.msra.mxu0 0.0
      %431 = vmatprep.subr.mxu0 0.0
      %432 = vmatpush1.msra.mxu0 0.0
      %433 = vmatprep.subr.mxu0 0.0
      %434 = vmatpush1.msra.mxu0 0.0
      %435 = vmatprep.subr.mxu0 0.0
      %436 = vmatpush1.msra.mxu0 0.0
      %437 = vmatprep.subr.mxu0 0.0
      %438 = vmatpush1.msra.mxu0 0.0
      %439 = vmatprep.subr.mxu0 0.0
      %440 = vmatpush1.msra.mxu0 0.0
      %441 = vmatprep.subr.mxu0 0.0
      %442 = vmatpush1.msra.mxu0 0.0
      %443 = vmatprep.subr.mxu0 0.0
      %444 = vmatpush1.msra.mxu0 0.0
      %445 = vmatprep.subr.mxu0 0.0
      %446 = vmatpush1.msra.mxu0 0.0
      %447 = vmatprep.subr.mxu0 0.0
      %448 = vmatpush1.msra.mxu0 0.0
      %449 = vmatprep.mubr.f32.mxu0 0.0
      %450 = vmatmul.mubr.f32.gmra.mrb[0].mxu0 %v374
      %v451 = vpop.f32.mrb[0].mxu0
      %v452 = vadd.f32 %v355, %v451
      %v453 = vpop.f32.mrb[0].mxu0
      %454 = vmatprep.mubr.f32.mxu0 0.0
      %455 = vmatmul.mubr.f32.gmra.mrb[0].mxu0 %v377
      %v456 = vpop.f32.mrb[0].mxu0
      %v457 = vadd.f32 %v360, %v456
      %v458 = vpop.f32.mrb[0].mxu0
      %459 = vmatprep.mubr.f32.mxu0 0.0
      %460 = vmatmul.mubr.f32.gmra.mrb[0].mxu0 %v380
      %v461 = vpop.f32.mrb[0].mxu0
      %v462 = vadd.f32 %v365, %v461
      %v463 = vpop.f32.mrb[0].mxu0
      %464 = vmatprep.mubr.f32.mxu0 0.0
      %465 = vmatmul.mubr.f32.gmra.mrb[0].mxu0 %v383
      %v466 = vpop.f32.mrb[0].mxu0
      %v467 = vadd.f32 %v370, %v466
      %v468 = vpop.f32.mrb[0].mxu0
      %469 = vdwg.mxu0
      %v470 = vmax.f32 %v452, 0.0
      %v471 = vmax.f32 %v457, 0.0
      %v472 = vmax.f32 %v462, 0.0
      %v473 = vmax.f32 %v467, 0.0
      %475 = vset.pattern.permute.xlu0 0
      %476 = vperm.xlu0 %475, %v324
      %v477 = vpop.permute.xlu0 %476
      %480 = vset.pattern.permute.xlu0 0
      %481 = vperm.xlu0 %480, %v325
      %v482 = vpop.permute.xlu0 %481
      %vm484 = vcmask 261120
      %v486 = vsel %vm484, %v318, 0
      %v489 = vsel %vm484, %v319, 0
      %491 = vmatprep.subr.mxu0 0.0
      %492 = vmatpush1.msra.mxu0 %v470
      %493 = vmatprep.subr.mxu0 0.0
      %494 = vmatpush1.msra.mxu0 %v471
      %495 = vmatprep.subr.mxu0 0.0
      %496 = vmatpush1.msra.mxu0 %v472
      %497 = vmatprep.subr.mxu0 0.0
      %498 = vmatpush1.msra.mxu0 %v473
      %499 = vmatprep.subr.mxu0 0.0
      %500 = vmatpush1.msra.mxu0 0.0
      %501 = vmatprep.subr.mxu0 0.0
      %502 = vmatpush1.msra.mxu0 0.0
      %503 = vmatprep.subr.mxu0 0.0
      %504 = vmatpush1.msra.mxu0 0.0
      %505 = vmatprep.subr.mxu0 0.0
      %506 = vmatpush1.msra.mxu0 0.0
      %507 = vmatprep.subr.mxu0 0.0
      %508 = vmatpush1.msra.mxu0 0.0
      %509 = vmatprep.subr.mxu0 0.0
      %510 = vmatpush1.msra.mxu0 0.0
      %511 = vmatprep.subr.mxu0 0.0
      %512 = vmatpush1.msra.mxu0 0.0
      %513 = vmatprep.subr.mxu0 0.0
      %514 = vmatpush1.msra.mxu0 0.0
      %515 = vmatprep.subr.mxu0 0.0
      %516 = vmatpush1.msra.mxu0 0.0
      %517 = vmatprep.subr.mxu0 0.0
      %518 = vmatpush1.msra.mxu0 0.0
      %519 = vmatprep.subr.mxu0 0.0
      %520 = vmatpush1.msra.mxu0 0.0
      %521 = vmatprep.subr.mxu0 0.0
      %522 = vmatpush1.msra.mxu0 0.0
      %523 = vmatprep.subr.mxu0 0.0
      %524 = vmatpush1.msra.mxu0 0.0
      %525 = vmatprep.subr.mxu0 0.0
      %526 = vmatpush1.msra.mxu0 0.0
      %527 = vmatprep.subr.mxu0 0.0
      %528 = vmatpush1.msra.mxu0 0.0
      %529 = vmatprep.subr.mxu0 0.0
      %530 = vmatpush1.msra.mxu0 0.0
      %531 = vmatprep.subr.mxu0 0.0
      %532 = vmatpush1.msra.mxu0 0.0
      %533 = vmatprep.subr.mxu0 0.0
      %534 = vmatpush1.msra.mxu0 0.0
      %535 = vmatprep.subr.mxu0 0.0
      %536 = vmatpush1.msra.mxu0 0.0
      %537 = vmatprep.subr.mxu0 0.0
      %538 = vmatpush1.msra.mxu0 0.0
      %539 = vmatprep.subr.mxu0 0.0
      %540 = vmatpush1.msra.mxu0 0.0
      %541 = vmatprep.subr.mxu0 0.0
      %542 = vmatpush1.msra.mxu0 0.0
      %543 = vmatprep.subr.mxu0 0.0
      %544 = vmatpush1.msra.mxu0 0.0
      %545 = vmatprep.subr.mxu0 0.0
      %546 = vmatpush1.msra.mxu0 0.0
      %547 = vmatprep.subr.mxu0 0.0
      %548 = vmatpush1.msra.mxu0 0.0
      %549 = vmatprep.subr.mxu0 0.0
      %550 = vmatpush1.msra.mxu0 0.0
      %551 = vmatprep.subr.mxu0 0.0
      %552 = vmatpush1.msra.mxu0 0.0
      %553 = vmatprep.subr.mxu0 0.0
      %554 = vmatpush1.msra.mxu0 0.0
      %555 = vmatprep.mubr.f32.mxu0 0.0
      %556 = vmatmul.mubr.f32.gmra.mrb[0].mxu0 %v486
      %v557 = vpop.f32.mrb[0].mxu0
      %v558 = vadd.f32 %v477, %v557
      %v559 = vpop.f32.mrb[0].mxu0
      %560 = vmatprep.mubr.f32.mxu0 0.0
      %561 = vmatmul.mubr.f32.gmra.mrb[0].mxu0 %v489
      %v562 = vpop.f32.mrb[0].mxu0
      %v563 = vadd.f32 %v482, %v562
      %v564 = vpop.f32.mrb[0].mxu0
      %565 = vdwg.mxu0
      %v566 = vadd.f32 %v350, %v558
      %v567 = vadd.f32 %v351, %v563
      %vm568 = vcmask 64512
      %569 = vst.msk [vmem:[%s309] sm:$0xff] %vm568, %v566
      %570 = vst.msk [vmem:[%s309 + $0x8] sm:$0xff] %vm568, %v567
      %p571 = scmp.lt.s32.totalorder %s22, 1
      %s572 = scalar_select %p571, %s22, 1
      %p573 = scmp.lt.s32.totalorder %s23, 0
      %s574 = scalar_select %p573, %s23, 0
      %s575 = smul.addr %s572, 2
      %s576 = sadd.s32 %s574, %s575
      %s577 = smul.addr %s576, 8
      %s578 = scalar_lea.vmem %s7, %s577
      // Predicated region
      $region49: #{tpu_custom_call.1} parent=47 // pred_check
        %p579 = pneg %p204
      $region50: #{tpu_custom_call.1} parent=47 // pred_check_branch
        %581 = sbr.rel (%p579) target = $region52
      $region51: #{tpu_custom_call.1} parent=47 // pred_region
        _
      $region52: #{tpu_custom_call.1} parent=47 // pred_fallthru
        _
    $region48: #{tpu_custom_call.1} parent=5 // pred_fallthru
      _
    %p582 = scmp.le.s32.totalorder 2, %s13
    // Predicated region
    $region53: #{tpu_custom_call.1} parent=5 // pred_check
      %p583 = pneg %p582
    $region54: #{tpu_custom_call.1} parent=5 // pred_check_branch
      %585 = sbr.rel (%p583) target = $region56
    $region55: #{tpu_custom_call.1} parent=5 // pred_region
      %s586 = ssub.s32 %s13, 2
      // Predicated region
      $region57: #{tpu_custom_call.1} parent=55 // pred_check
        %p587 = pneg %p210
      $region58: #{tpu_custom_call.1} parent=55 // pred_check_branch
        %589 = sbr.rel (%p587) target = $region60
      $region59: #{tpu_custom_call.1} parent=55 // pred_region
        %p590 = scmp.lt.s32.totalorder %s24, 1
        %s591 = scalar_select %p590, %s24, 1
        %p592 = scmp.lt.s32.totalorder %s25, 0
        %s593 = scalar_select %p592, %s25, 0
        %s594 = smul.addr %s591, 2
        %s595 = sadd.s32 %s593, %s594
        %s596 = smul.addr %s595, 8
        %s597 = scalar_lea.vmem %s7, %s596
      $region60: #{tpu_custom_call.1} parent=55 // pred_fallthru
        _
    $region56: #{tpu_custom_call.1} parent=5 // pred_fallthru
      _
  $region6: #{tpu_custom_call.1} parent=0 // loop_footer
    %s17 = sadd.s32 1, %s13
  $region7: #{tpu_custom_call.1} parent=0 // loop_footer_branch
    %12 = sbr.rel target = $region3
  $region8: #{tpu_custom_call.1} parent=0 // loop_exit
    _

</llo_original>
